<compile_context>
chip_gen: v5e
topology: v5e:2x2
jax: 0.10.0
libtpu: 0.0.40
codegen_flags: <defaults>
</compile_context>

<pallas_src>
import functools

import jax
import jax.numpy as jnp
import numpy as np
from jax.experimental import pallas as pl
from jax.experimental.pallas import tpu as pltpu

# ----------------------------------------------------------------------------
# Static geometry implied by the PyTorch module:
#   Expert1.fc = Linear(32 * 14 * 7, experts_out)  ->  input spatial (56, 30)
#   gate_input_size = input_size * 30 = 56 * 30    ->  input_size = 56
# ----------------------------------------------------------------------------
H_IN, W_IN = 56, 30
C_IN = 1
C1, C2 = 16, 32
EOUT = 32                                        # later CGC layers hard-wire 32
WP1 = W_IN + 2                                   # 32  row stride, conv1 stage
L1 = -(-((H_IN + 2) * WP1) // 128) * 128         # 1920 (lane-padded)
H1, W1 = H_IN // 2, W_IN // 2                    # 28, 15
WP2 = W1 + 2                                     # 17  row stride, conv2 stage
L2 = -(-((H1 + 2) * WP2) // 128) * 128           # 512
H2, W2 = H1 // 2, W1 // 2                        # 14, 7
N_POS = H2 * W2                                  # 98 valid flattened positions
L_FEAT = 128                                     # lane-dense padded positions
K_FC = C2 * L_FEAT                               # 4096
GIN1 = C_IN * H_IN * W_IN                        # 1680 (= input_size * 30)
GINP = -(-GIN1 // 128) * 128                     # 1792 (lane-padded gate input)
N_TAPS = 16                                      # 9 real conv taps + 7 zero rows
TAPS = tuple((kh, kw) for kh in range(3) for kw in range(3))


# ----------------------------------------------------------------------------
# pltpu.roll direction probe (cached, runs eagerly even if first hit inside a
# jit trace -- fixes the previous "__main__ only" deployment hazard).
# ----------------------------------------------------------------------------
def _roll_probe_kernel(x_ref, o_ref):
    o_ref[...] = pltpu.roll(x_ref[...], shift=1, axis=1)


_ROLL_DIR = {}


def _roll_toward_higher():
    """True iff pltpu.roll follows the jnp.roll convention out[i] = in[i - s]."""
    if "v" not in _ROLL_DIR:
        with jax.ensure_compile_time_eval():
            x = jnp.tile(jnp.arange(128, dtype=jnp.float32)[None, :], (8, 1))
            y = pl.pallas_call(
                _roll_probe_kernel,
                out_shape=jax.ShapeDtypeStruct((8, 128), jnp.float32),
                grid=(1,),
                in_specs=[pl.BlockSpec((8, 128), lambda i: (0, 0))],
                out_specs=pl.BlockSpec((8, 128), lambda i: (0, 0)),
            )(x)
        v = float(np.asarray(jax.block_until_ready(y))[0, 0])
        if v == 127.0:
            _ROLL_DIR["v"] = True
        elif v == 1.0:
            _ROLL_DIR["v"] = False
        else:
            raise RuntimeError(f"unexpected pltpu.roll behaviour (probe={v})")
    return _ROLL_DIR["v"]


def _shift_lanes(v, s, length):
    """out[..., i] = in[..., (i + s) % length] for static s (lane axis)."""
    s = s % length
    if s == 0:
        return v
    amt = (length - s) if _roll_toward_higher() else s
    return pltpu.roll(v, shift=amt, axis=1)


# ----------------------------------------------------------------------------
# Kernel 1: fused Expert1 trunk for all experts of one image (grid over batch)
# ----------------------------------------------------------------------------
def _expert1_trunk_kernel(x_ref, w1_ref, b1_ref, w2_ref, b2_ref,
                          s1_ref, s2_ref, o_ref, xt_ref):
    f32, bf16 = jnp.float32, jnp.bfloat16
    x2d = x_ref[0]                                           # (1, L1) f32

    # conv1 (+bias+ReLU): stage the 9 lane-shifted taps of the shared image in
    # a VMEM scratch, then ONE MXU matmul covering every expert (M = E*16).
    xt_ref[...] = jnp.zeros(xt_ref.shape, f32)
    for t, (kh, kw) in enumerate(TAPS):
        xt_ref[pl.ds(t, 1), :] = _shift_lanes(x2d, kh * WP1 + kw, L1)
    a1 = jnp.dot(w1_ref[...], xt_ref[...].astype(bf16),
                 preferred_element_type=f32) + b1_ref[...]   # (E*16, L1)
    a1 = jnp.maximum(a1, 0.0)

    # fused 2x2 max-pool (two rolls + max), then a constant 0/1 gather matmul
    # that also rebuilds the zero padding of conv2's input layout.
    m1 = jnp.maximum(a1, _shift_lanes(a1, WP1, L1))
    m1 = jnp.maximum(m1, _shift_lanes(m1, 1, L1))
    c2in = jnp.dot(m1.astype(bf16), s1_ref[...],
                   preferred_element_type=f32)               # (E*16, L2) f32

    # conv2 (+bias+ReLU): 9 shifted copies concatenated along K, one
    # block-diagonal bf16 MXU matmul for every expert (M = E*32, K = 9*E*16).
    taps2 = [_shift_lanes(c2in, kh * WP2 + kw, L2).astype(bf16)
             for (kh, kw) in TAPS]
    ct = jnp.concatenate(taps2, axis=0)                      # (9*E*16, L2)
    a2 = jnp.dot(w2_ref[...], ct, preferred_element_type=f32) + b2_ref[...]
    a2 = jnp.maximum(a2, 0.0)                                # (E*32, L2)

    # fused 2x2 max-pool + gather into a lane-dense (E*32, 128) feature slab.
    m2 = jnp.maximum(a2, _shift_lanes(a2, WP2, L2))
    m2 = jnp.maximum(m2, _shift_lanes(m2, 1, L2))
    feat = jnp.dot(m2.astype(bf16), s2_ref[...], preferred_element_type=f32)
    o_ref[0] = feat.astype(o_ref.dtype)


def expert1_trunk(xconv, w1s, b1s, w2bd, b2s, s1, s2):
    bsz = xconv.shape[0]
    ec1 = w1s.shape[0]
    ec2 = w2bd.shape[0]
    return pl.pallas_call(
        _expert1_trunk_kernel,
        out_shape=jax.ShapeDtypeStruct((bsz, ec2, L_FEAT), jnp.bfloat16),
        grid=(bsz,),
        in_specs=[
            pl.BlockSpec((1, C_IN, L1), lambda b: (b, 0, 0)),
            pl.BlockSpec((ec1, N_TAPS), lambda b: (0, 0)),
            pl.BlockSpec((ec1, 1), lambda b: (0, 0)),
            pl.BlockSpec((ec2, 9 * ec1), lambda b: (0, 0)),
            pl.BlockSpec((ec2, 1), lambda b: (0, 0)),
            pl.BlockSpec((L1, L2), lambda b: (0, 0)),
            pl.BlockSpec((L2, L_FEAT), lambda b: (0, 0)),
        ],
        out_specs=pl.BlockSpec((1, ec2, L_FEAT), lambda b: (b, 0, 0)),
        scratch_shapes=[pltpu.VMEM((N_TAPS, L1), jnp.float32)],
        compiler_params=pltpu.CompilerParams(
            dimension_semantics=("parallel",),
            vmem_limit_bytes=32 * 1024 * 1024),
    )(xconv, w1s, b1s, w2bd, b2s, s1, s2)


# ----------------------------------------------------------------------------
# Kernel 2: the whole post-conv tail (FC, gates, Expert2 CGC layers, towers)
# ----------------------------------------------------------------------------
def _tail_kernel(xg_ref, feat_ref, wfc_ref, bfc_ref, wg1_ref, bg1_ref,
                 cw1_ref, cb1_ref, cw2_ref, cb2_ref, cwg_ref, cbg_ref,
                 tw1_ref, tb1_ref, tw2_ref, tb2_ref, y1_ref, y2_ref,
                 *, p, s, n_layers, od1, od2):
    f32, bf16 = jnp.float32, jnp.bfloat16
    e_total = 2 * p + s
    n1 = p + s
    nsh = 2 * p + s
    idx_t1 = tuple(range(p)) + tuple(range(2 * p, 2 * p + s))
    idx_t2 = tuple(range(p, 2 * p)) + tuple(range(2 * p, 2 * p + s))
    idx_sh = tuple(range(e_total))

    def softmax(z):
        m = jnp.max(z, axis=1, keepdims=True)
        ez = jnp.exp(z - m)
        return ez / jnp.sum(ez, axis=1, keepdims=True)

    def mix(eo, sel, idxs):
        acc = sel[:, 0:1] * eo[:, idxs[0] * EOUT:(idxs[0] + 1) * EOUT]
        for a in range(1, len(idxs)):
            j = idxs[a]
            acc = acc + sel[:, a:a + 1] * eo[:, j * EOUT:(j + 1) * EOUT]
        return acc

    # ---- CGC layer 1: per-expert FC on the conv features (lane-dense out) ----
    eo_parts = []
    for e in range(e_total):
        fe = feat_ref[:, e, :]                               # (B, 4096) bf16
        eo_parts.append(jnp.dot(fe, wfc_ref[e],
                                preferred_element_type=f32) + bfc_ref[e])
    eo = jnp.concatenate(eo_parts, axis=1)                   # (B, E*32) f32

    # three layer-1 gates share the same flattened-x input -> one matmul.
    g1 = jnp.dot(xg_ref[...].astype(bf16), wg1_ref[...],
                 preferred_element_type=f32) + bg1_ref[...]
    # TODO(synk): nn.Dropout (after softmax / inside experts & towers) is
    # stochastic only in training mode; this forward is eval-mode identity.
    out_t1 = mix(eo, softmax(g1[:, 0:n1]), idx_t1)
    out_t2 = mix(eo, softmax(g1[:, n1:2 * n1]), idx_t2)
    out_sh = mix(eo, softmax(g1[:, 2 * n1:2 * n1 + nsh]), idx_sh)

    # ---- later CGC layers: Expert2 MLPs + gates, block-diagonal over experts
    for li in range(n_layers):
        last = li == n_layers - 1
        xin = jnp.concatenate([out_t1] * p + [out_t2] * p + [out_sh] * s,
                              axis=1).astype(bf16)           # (B, E*32)
        h = jnp.dot(xin, cw1_ref[li], preferred_element_type=f32) + cb1_ref[li]
        h = jnp.maximum(h, 0.0)
        eo = jnp.dot(h.astype(bf16), cw2_ref[li],
                     preferred_element_type=f32) + cb2_ref[li]   # (B, E*32)
        gin = jnp.concatenate([out_t1, out_t2, out_sh], axis=1).astype(bf16)
        gl = jnp.dot(gin, cwg_ref[li], preferred_element_type=f32) + cbg_ref[li]
        new_t1 = mix(eo, softmax(gl[:, 0:n1]), idx_t1)
        new_t2 = mix(eo, softmax(gl[:, n1:2 * n1]), idx_t2)
        if not last:
            out_sh = mix(eo, softmax(gl[:, 2 * n1:2 * n1 + nsh]), idx_sh)
        out_t1, out_t2 = new_t1, new_t2

    # ---- both towers, fused block-diagonally ----
    tin = jnp.concatenate([out_t1, out_t2], axis=1).astype(bf16)  # (B, 64)
    th = jnp.maximum(jnp.dot(tin, tw1_ref[...],
                             preferred_element_type=f32) + tb1_ref[...], 0.0)
    ty = jnp.dot(th.astype(bf16), tw2_ref[...],
                 preferred_element_type=f32) + tb2_ref[...]
    ty = 1.0 / (1.0 + jnp.exp(-ty))
    y1_ref[...] = ty[:, 0:od1]
    y2_ref[...] = ty[:, od1:od1 + od2]


def ple_tail(xg, feat, pk, *, p, s, emotion_dim, focus_dim):
    bsz = xg.shape[0]
    n_layers = pk["cw1"].shape[0]
    ins = (xg, feat, pk["wfc"], pk["bfc"], pk["wg1"], pk["bg1"],
           pk["cw1"], pk["cb1"], pk["cw2"], pk["cb2"], pk["cwg"], pk["cbg"],
           pk["tw1"], pk["tb1"], pk["tw2"], pk["tb2"])

    def full_spec(arr):
        if arr.ndim == 2:
            return pl.BlockSpec(arr.shape, lambda i: (0, 0))
        return pl.BlockSpec(arr.shape, lambda i: (0, 0, 0))

    kernel = functools.partial(_tail_kernel, p=p, s=s, n_layers=n_layers,
                               od1=emotion_dim, od2=focus_dim)
    return pl.pallas_call(
        kernel,
        out_shape=(jax.ShapeDtypeStruct((bsz, emotion_dim), jnp.float32),
                   jax.ShapeDtypeStruct((bsz, focus_dim), jnp.float32)),
        grid=(1,),
        in_specs=[full_spec(a) for a in ins],
        out_specs=(pl.BlockSpec((bsz, emotion_dim), lambda i: (0, 0)),
                   pl.BlockSpec((bsz, focus_dim), lambda i: (0, 0))),
        compiler_params=pltpu.CompilerParams(
            dimension_semantics=("arbitrary",)),
    )(*ins)


# ----------------------------------------------------------------------------
# Host-side layout prep (init-time / tiny glue)
# ----------------------------------------------------------------------------
def _prep_conv_input(x):
    """(B,1,H,W) -> zero padded, lane-flattened (B,1,L1) image."""
    bsz = x.shape[0]
    xp = jnp.pad(x, ((0, 0), (0, 0), (1, 1), (1, 1)))        # (B,1,H+2,W+2)
    xf = xp.reshape(bsz, C_IN, (H_IN + 2) * WP1)
    return jnp.pad(xf, ((0, 0), (0, 0), (0, L1 - (H_IN + 2) * WP1)))


def _pool_select_matrices():
    """0/1 matrices: pool1->padded conv2 layout, pool2->lane-dense output."""
    s1 = np.zeros((L1, L2), np.float32)
    for ho in range(H1):
        for wo in range(W1):
            s1[(2 * ho) * WP1 + 2 * wo, (ho + 1) * WP2 + (wo + 1)] = 1.0
    s2 = np.zeros((L2, L_FEAT), np.float32)
    for hh in range(H2):
        for ww in range(W2):
            s2[(2 * hh) * WP2 + 2 * ww, hh * W2 + ww] = 1.0
    return jnp.asarray(s1, jnp.bfloat16), jnp.asarray(s2, jnp.bfloat16)


def pack_params(raw, *, num_specific, num_shared, experts_hidden,
                towers_hidden, emotion_dim, focus_dim):
    p, s = num_specific, num_shared
    e_total = 2 * p + s
    n1, nsh = p + s, 2 * p + s
    ng = 2 * n1 + nsh
    eh, th = experts_hidden, towers_hidden

    l1 = raw["layer1"]
    e1 = list(l1["task1"]) + list(l1["task2"]) + list(l1["shared"])

    # ---- Expert1 trunk weights: experts stacked along M, taps along K ----
    w1s = np.zeros((e_total * C1, N_TAPS), np.float32)
    b1s = np.zeros((e_total * C1, 1), np.float32)
    w2bd = np.zeros((e_total * C2, 9 * e_total * C1), np.float32)
    b2s = np.zeros((e_total * C2, 1), np.float32)
    wfc = np.zeros((e_total, K_FC, EOUT), np.float32)
    bfc = np.zeros((e_total, 1, EOUT), np.float32)
    for e, ep in enumerate(e1):
        w1 = np.asarray(ep["w1"], np.float32).reshape(C1, 9)
        w1s[e * C1:(e + 1) * C1, :9] = w1
        b1s[e * C1:(e + 1) * C1, 0] = np.asarray(ep["b1"], np.float32)
        w2 = np.asarray(ep["w2"], np.float32)                # (32, 16, 3, 3)
        for t, (kh, kw) in enumerate(TAPS):
            col0 = t * e_total * C1 + e * C1
            w2bd[e * C2:(e + 1) * C2, col0:col0 + C1] = w2[:, :, kh, kw]
        b2s[e * C2:(e + 1) * C2, 0] = np.asarray(ep["b2"], np.float32)
        wf = np.asarray(ep["wfc"], np.float32).reshape(EOUT, C2, N_POS)
        wp = np.zeros((C2, L_FEAT, EOUT), np.float32)
        wp[:, :N_POS, :] = np.transpose(wf, (1, 2, 0))
        wfc[e] = wp.reshape(K_FC, EOUT)
        bfc[e, 0] = np.asarray(ep["bfc"], np.float32)

    # ---- layer-1 gates: three gates share input -> concat along N ----
    wg1 = np.zeros((GINP, ng), np.float32)
    bg1 = np.zeros((1, ng), np.float32)
    wg1[:GIN1, 0:n1] = np.asarray(l1["gate_t1"]["w"], np.float32).T
    wg1[:GIN1, n1:2 * n1] = np.asarray(l1["gate_t2"]["w"], np.float32).T
    wg1[:GIN1, 2 * n1:] = np.asarray(l1["gate_sh"]["w"], np.float32).T
    bg1[0, 0:n1] = np.asarray(l1["gate_t1"]["b"], np.float32)
    bg1[0, n1:2 * n1] = np.asarray(l1["gate_t2"]["b"], np.float32)
    bg1[0, 2 * n1:] = np.asarray(l1["gate_sh"]["b"], np.float32)

    # ---- Expert2 CGC layers: block-diagonal over experts (lane-dense) ----
    n_layers = len(raw["cgc"])
    cw1 = np.zeros((n_layers, e_total * EOUT, e_total * eh), np.float32)
    cb1 = np.zeros((n_layers, 1, e_total * eh), np.float32)
    cw2 = np.zeros((n_layers, e_total * eh, e_total * EOUT), np.float32)
    cb2 = np.zeros((n_layers, 1, e_total * EOUT), np.float32)
    cwg = np.zeros((n_layers, 3 * EOUT, ng), np.float32)
    cbg = np.zeros((n_layers, 1, ng), np.float32)
    for li, lp in enumerate(raw["cgc"]):
        exps = list(lp["task1"]) + list(lp["task2"]) + list(lp["shared"])
        for e, ep in enumerate(exps):
            cw1[li, e * EOUT:(e + 1) * EOUT, e * eh:(e + 1) * eh] = \
                np.asarray(ep["w1"], np.float32).T
            cb1[li, 0, e * eh:(e + 1) * eh] = np.asarray(ep["b1"], np.float32)
            cw2[li, e * eh:(e + 1) * eh, e * EOUT:(e + 1) * EOUT] = \
                np.asarray(ep["w2"], np.float32).T
            cb2[li, 0, e * EOUT:(e + 1) * EOUT] = np.asarray(ep["b2"], np.float32)
        cwg[li, 0:EOUT, 0:n1] = np.asarray(lp["gate_t1"]["w"], np.float32).T
        cwg[li, EOUT:2 * EOUT, n1:2 * n1] = \
            np.asarray(lp["gate_t2"]["w"], np.float32).T
        cwg[li, 2 * EOUT:, 2 * n1:] = np.asarray(lp["gate_sh"]["w"], np.float32).T
        cbg[li, 0, 0:n1] = np.asarray(lp["gate_t1"]["b"], np.float32)
        cbg[li, 0, n1:2 * n1] = np.asarray(lp["gate_t2"]["b"], np.float32)
        cbg[li, 0, 2 * n1:] = np.asarray(lp["gate_sh"]["b"], np.float32)

    # ---- both towers, block-diagonal ----
    tw1 = np.zeros((2 * EOUT, 2 * th), np.float32)
    tb1 = np.zeros((1, 2 * th), np.float32)
    tw2 = np.zeros((2 * th, emotion_dim + focus_dim), np.float32)
    tb2 = np.zeros((1, emotion_dim + focus_dim), np.float32)
    tw1[0:EOUT, 0:th] = np.asarray(raw["tower1"]["w1"], np.float32).T
    tw1[EOUT:, th:] = np.asarray(raw["tower2"]["w1"], np.float32).T
    tb1[0, 0:th] = np.asarray(raw["tower1"]["b1"], np.float32)
    tb1[0, th:] = np.asarray(raw["tower2"]["b1"], np.float32)
    tw2[0:th, 0:emotion_dim] = np.asarray(raw["tower1"]["w2"], np.float32).T
    tw2[th:, emotion_dim:] = np.asarray(raw["tower2"]["w2"], np.float32).T
    tb2[0, 0:emotion_dim] = np.asarray(raw["tower1"]["b2"], np.float32)
    tb2[0, emotion_dim:] = np.asarray(raw["tower2"]["b2"], np.float32)

    s1m, s2m = _pool_select_matrices()

    def b16(a):
        return jnp.asarray(a, jnp.bfloat16)

    def f32(a):
        return jnp.asarray(a, jnp.float32)

    return dict(
        w1s=b16(w1s), b1s=f32(b1s), w2bd=b16(w2bd), b2s=f32(b2s),
        s1=s1m, s2=s2m,
        wfc=b16(wfc), bfc=f32(bfc), wg1=b16(wg1), bg1=f32(bg1),
        cw1=b16(cw1), cb1=f32(cb1), cw2=b16(cw2), cb2=f32(cb2),
        cwg=b16(cwg), cbg=f32(cbg),
        tw1=b16(tw1), tb1=f32(tb1), tw2=b16(tw2), tb2=f32(tb2),
    )


# ----------------------------------------------------------------------------
# Pallas forward pass (2 pallas_calls total)
# ----------------------------------------------------------------------------
def ple_forward_pallas(packed, x, *, num_specific, num_shared,
                       emotion_dim, focus_dim):
    bsz = x.shape[0]
    p, s = num_specific, num_shared
    e_total = 2 * p + s

    xconv = _prep_conv_input(x)
    feat = expert1_trunk(xconv, packed["w1s"], packed["b1s"], packed["w2bd"],
                         packed["b2s"], packed["s1"], packed["s2"])
    # (B, E*32, 128) -> (B, E, 4096): pure metadata reshape (row-major match);
    # PyTorch's NCHW flatten order is folded into the FC weight at pack time.
    feat = feat.reshape(bsz, e_total, K_FC)

    xg = x.reshape(bsz, -1)
    xg = jnp.pad(xg, ((0, 0), (0, GINP - xg.shape[1])))
    return ple_tail(xg, feat, packed, p=p, s=s,
                    emotion_dim=emotion_dim, focus_dim=focus_dim)


# ----------------------------------------------------------------------------
# Parameter init (raw, PyTorch-layout weights)
# ----------------------------------------------------------------------------
def init_raw_params(key, *, num_specific, num_shared, experts_out,
                    experts_hidden, towers_hidden, emotion_dim, focus_dim,
                    num_cgc_layers):
    keys = iter(jax.random.split(key, 512))

    def nrm(shape, scale):
        return scale * jax.random.normal(next(keys), shape, jnp.float32)

    def expert1_raw():
        return dict(w1=nrm((C1, C_IN, 3, 3), 0.2), b1=nrm((C1,), 0.05),
                    w2=nrm((C2, C1, 3, 3), 0.08), b2=nrm((C2,), 0.05),
                    wfc=nrm((experts_out, C2 * N_POS), 0.02),
                    bfc=nrm((experts_out,), 0.05))

    def expert2_raw():
        return dict(w1=nrm((experts_hidden, experts_out), 0.15),
                    b1=nrm((experts_hidden,), 0.05),
                    w2=nrm((experts_out, experts_hidden), 0.1),
                    b2=nrm((experts_out,), 0.05))

    def gate_raw(gin, n):
        return dict(w=nrm((n, gin), 1.0 / float(np.sqrt(gin))),
                    b=nrm((n,), 0.05))

    layer1 = dict(
        task1=[expert1_raw() for _ in range(num_specific)],
        task2=[expert1_raw() for _ in range(num_specific)],
        shared=[expert1_raw() for _ in range(num_shared)],
        gate_t1=gate_raw(GIN1, num_specific + num_shared),
        gate_t2=gate_raw(GIN1, num_specific + num_shared),
        gate_sh=gate_raw(GIN1, 2 * num_specific + num_shared),
    )
    cgc = []
    for _ in range(num_cgc_layers):
        cgc.append(dict(
            task1=[expert2_raw() for _ in range(num_specific)],
            task2=[expert2_raw() for _ in range(num_specific)],
            shared=[expert2_raw() for _ in range(num_shared)],
            gate_t1=gate_raw(experts_out, num_specific + num_shared),
            gate_t2=gate_raw(experts_out, num_specific + num_shared),
            gate_sh=gate_raw(experts_out, 2 * num_specific + num_shared),
        ))

    def tower_raw(out_dim):
        return dict(w1=nrm((towers_hidden, experts_out), 0.2),
                    b1=nrm((towers_hidden,), 0.05),
                    w2=nrm((out_dim, towers_hidden), 0.2),
                    b2=nrm((out_dim,), 0.05))

    return dict(layer1=layer1, cgc=cgc, tower1=tower_raw(emotion_dim),
                tower2=tower_raw(focus_dim))


# ----------------------------------------------------------------------------
# Pure-JAX reference (mirrors the PyTorch forward, dropout in eval mode)
# ----------------------------------------------------------------------------
def _maxpool_ref(y):
    b, c, h, w = y.shape
    h2, w2 = h // 2, w // 2
    y = y[:, :, :h2 * 2, :w2 * 2]
    return y.reshape(b, c, h2, 2, w2, 2).max(axis=(3, 5))


def ple_forward_reference(raw, x):
    dn = ("NCHW", "OIHW", "NCHW")

    def expert1(xx, ep):
        y = jax.lax.conv_general_dilated(xx, ep["w1"], (1, 1),
                                         ((1, 1), (1, 1)), dimension_numbers=dn)
        y = jax.nn.relu(y + ep["b1"][None, :, None, None])
        y = _maxpool_ref(y)
        y = jax.lax.conv_general_dilated(y, ep["w2"], (1, 1),
                                         ((1, 1), (1, 1)), dimension_numbers=dn)
        y = jax.nn.relu(y + ep["b2"][None, :, None, None])
        y = _maxpool_ref(y)
        return y.reshape(y.shape[0], -1) @ ep["wfc"].T + ep["bfc"]

    def expert2(xx, ep):
        h = jax.nn.relu(xx @ ep["w1"].T + ep["b1"])
        return h @ ep["w2"].T + ep["b2"]

    def gate(xx, gp):
        return jax.nn.softmax(xx @ gp["w"].T + gp["b"], axis=1)

    def mix(stacked, sel):
        return jnp.einsum("abc,ba->bc", stacked, sel)

    l1 = raw["layer1"]
    t1_o = jnp.stack([expert1(x, ep) for ep in l1["task1"]])
    t2_o = jnp.stack([expert1(x, ep) for ep in l1["task2"]])
    sh_o = jnp.stack([expert1(x, ep) for ep in l1["shared"]])
    xf = x.reshape(x.shape[0], -1)
    out_t1 = mix(jnp.concatenate([t1_o, sh_o], 0), gate(xf, l1["gate_t1"]))
    out_t2 = mix(jnp.concatenate([t2_o, sh_o], 0), gate(xf, l1["gate_t2"]))
    out_sh = mix(jnp.concatenate([t1_o, t2_o, sh_o], 0), gate(xf, l1["gate_sh"]))
    outs = (out_sh, out_t1, out_t2)

    n_layers = len(raw["cgc"])
    for li, lp in enumerate(raw["cgc"]):
        last = li == n_layers - 1
        in_sh, in_t1, in_t2 = outs
        t1_o = jnp.stack([expert2(in_t1, ep) for ep in lp["task1"]])
        t2_o = jnp.stack([expert2(in_t2, ep) for ep in lp["task2"]])
        sh_o = jnp.stack([expert2(in_sh, ep) for ep in lp["shared"]])
        out_t1 = mix(jnp.concatenate([t1_o, sh_o], 0), gate(in_t1, lp["gate_t1"]))
        out_t2 = mix(jnp.concatenate([t2_o, sh_o], 0), gate(in_t2, lp["gate_t2"]))
        if last:
            outs = (out_t1, out_t2)
        else:
            out_sh = mix(jnp.concatenate([t1_o, t2_o, sh_o], 0),
                         gate(in_sh, lp["gate_sh"]))
            outs = (out_sh, out_t1, out_t2)

    out_t1, out_t2 = outs

    def tower(xx, tp):
        h = jax.nn.relu(xx @ tp["w1"].T + tp["b1"])
        return jax.nn.sigmoid(h @ tp["w2"].T + tp["b2"])

    return tower(out_t1, raw["tower1"]), tower(out_t2, raw["tower2"])


# ----------------------------------------------------------------------------
if __name__ == "__main__":
    _roll_toward_higher()          # prime the roll-direction probe before jit

    B = 2
    num_specific, num_shared = 2, 2
    experts_out = 32               # later CGC layers hard-wire input_size=32
    experts_hidden = 64
    towers_hidden = 16
    emotion_dim, focus_dim = 3, 2
    num_cgc_layers = 2
    assert experts_out == EOUT

    key = jax.random.PRNGKey(0)
    kx, kp = jax.random.split(key)
    # Input spatial (56, 30): two 2x2 max-pools -> (14, 7) so fc sees 32*14*7,
    # and the flattened gate input 56*30 matches input_size * 30.
    x = jax.random.normal(kx, (B, C_IN, H_IN, W_IN), jnp.float32)

    raw = init_raw_params(kp, num_specific=num_specific, num_shared=num_shared,
                          experts_out=experts_out,
                          experts_hidden=experts_hidden,
                          towers_hidden=towers_hidden,
                          emotion_dim=emotion_dim, focus_dim=focus_dim,
                          num_cgc_layers=num_cgc_layers)
    packed = pack_params(raw, num_specific=num_specific,
                         num_shared=num_shared,
                         experts_hidden=experts_hidden,
                         towers_hidden=towers_hidden,
                         emotion_dim=emotion_dim, focus_dim=focus_dim)

    fwd = jax.jit(functools.partial(ple_forward_pallas,
                                    num_specific=num_specific,
                                    num_shared=num_shared,
                                    emotion_dim=emotion_dim,
                                    focus_dim=focus_dim))
    y1, y2 = fwd(packed, x)
    y1, y2 = jax.block_until_ready((y1, y2))
    assert y1.shape == (B, emotion_dim) and y2.shape == (B, focus_dim)

    r1, r2 = ple_forward_reference(raw, x)
    np.testing.assert_allclose(np.asarray(y1), np.asarray(r1),
                               rtol=3e-2, atol=3e-2)
    np.testing.assert_allclose(np.asarray(y2), np.asarray(r2),
                               rtol=3e-2, atol=3e-2)
    print("KERNEL_OK")
</pallas_src>

<mosaic_0001>
module attributes {stable_mosaic.version = 11 : i64} {
  func.func @_roll_probe_kernel(%arg0: i32, %arg1: memref<8x128xf32, #tpu.memory_space<vmem>>, %arg2: memref<8x128xf32, #tpu.memory_space<vmem>>) attributes {dimension_semantics = [#tpu.dimension_semantics<arbitrary>], iteration_bounds = array<i64: 1>, scalar_prefetch = 0 : i64, scratch_operands = 0 : i64, tpu.core_type = #tpu.core_type<tc>, window_params = [{pipeline_mode = #tpu.pipeline_mode<synchronous>, transform_indices = @transform_0, window_bounds = array<i64: 8, 128>}, {pipeline_mode = #tpu.pipeline_mode<synchronous>, transform_indices = @transform_1, window_bounds = array<i64: 8, 128>}]} {
    %c0 = arith.constant 0 : index
    %c0_0 = arith.constant 0 : index
    %0 = vector.load %arg1[%c0, %c0_0] : memref<8x128xf32, #tpu.memory_space<vmem>>, vector<8x128xf32>
    %c1_i32 = arith.constant 1 : i32
    %1 = tpu.dynamic_rotate %0 by %c1_i32 dim 1 : vector<8x128xf32>, i32 -> vector<8x128xf32>
    %c0_1 = arith.constant 0 : index
    %c0_2 = arith.constant 0 : index
    %2 = vector.load %arg2[%c0_1, %c0_2] : memref<8x128xf32, #tpu.memory_space<vmem>>, vector<8x128xf32>
    tpu.vector_store %arg2[%c0_1, %c0_2], %1 {strides = array<i32>} : memref<8x128xf32, #tpu.memory_space<vmem>>, vector<8x128xf32>,
    return
  }
  func.func @transform_0(%arg0: i32) -> (i32, i32) {
    %c0_i32 = arith.constant 0 : i32
    %c0_i32_0 = arith.constant 0 : i32
    %c0_i32_1 = arith.constant 0 : i32
    return %c0_i32, %c0_i32_0 : i32, i32
  }
  func.func @transform_1(%arg0: i32) -> (i32, i32) {
    %c0_i32 = arith.constant 0 : i32
    %c0_i32_0 = arith.constant 0 : i32
    %c0_i32_1 = arith.constant 0 : i32
    return %c0_i32, %c0_i32_0 : i32, i32
  }
}

</mosaic_0001>

<llo_original>
// kernel: tpu_custom_call.1
$region0: #{tpu_custom_call.1}
  #allocation0 [shape = 'u32[]', space=smem, size = 0x4, offset = 0x4, fixed_abs, tag = 'smem constant byte address 0x4 - core index']
  #allocation1 [shape = 'u32[72,128]{1,0:T(1,128)}', space=vmem, size = 0x9000, scoped, tag = 'internal scratch']
  %s0 = inlined_call_operand.hbm [shape: f32[8,128], index: 0, kind: input, shape index: {}]
  %s1 = inlined_call_operand.hbm [shape: f32[8,128], index: 1, kind: output, shape index: {}]
  %s2 = sld [smem:[#allocation0]]
  $region18: #{tpu_custom_call.1} parent=0
    _
  %s4 = ssub.s32 1, %s2
  %s5 = scalar_select 0, %s4, %s2
  $region1: #{tpu_custom_call.1} parent=0
    #allocation2 [shape = 'u8[4096]{0}', space=vmem, size = 0x1000, scoped, tag = 'input window, operand 0, single buffered']
    #allocation3 [shape = 's32[1]{0}', space=sflag, size = 0x4, scoped, tag = 'scoped memory for tpu_custom_call.1']
    #allocation4 [shape = 's32[1]{0}', space=sflag, size = 0x4, scoped, tag = 'scoped memory for tpu_custom_call.1']
    #allocation5 [shape = 'u8[4096]{0}', space=vmem, size = 0x1000, scoped, tag = 'output window, operand 0, single buffered']
    %6 = vsyncpa [#allocation3], 0
    %7 = vsyncpa [#allocation4], 0
    // Predicated region
    $region2: #{tpu_custom_call.1} parent=1 // pred_check
      _
    $region3: #{tpu_custom_call.1} parent=1 // pred_check_branch
      %9 = sbr.rel (0) target = $region5
    $region4: #{tpu_custom_call.1} parent=1 // pred_region
      %11 = vsyncadd [#allocation3], 0
      %s13 = sshll.u32 %s0, 4
      %s14 = int_to_ptr.hbm [resolvable:$true] %s13
      %s15 = sshll.u32 [#allocation2], 4
      %s16 = int_to_ptr.vmem [resolvable:$true] %s15
      %18 = dma.hbm_to_vmem [thread:$0]  %s14, 128, %s16, [#allocation3]
    $region5: #{tpu_custom_call.1} parent=1 // pred_fallthru
      _
    // Predicated region
    $region6: #{tpu_custom_call.1} parent=1 // pred_check
      _
    $region7: #{tpu_custom_call.1} parent=1 // pred_check_branch
      %20 = sbr.rel (0) target = $region9
    $region8: #{tpu_custom_call.1} parent=1 // pred_region
      %22 = dma.done [#allocation3], 128
    $region9: #{tpu_custom_call.1} parent=1 // pred_fallthru
      _
    %v23 = vld [vmem:[#allocation2] sm:$0xff]
    %24 = vrot.lane.b32.xlu0 %v23, 1
    %v25 = vpop.permute.xlu0 %24
    %26 = vst [vmem:[#allocation5] sm:$0xff] %v25
    // Predicated region
    $region10: #{tpu_custom_call.1} parent=1 // pred_check
      _
    $region11: #{tpu_custom_call.1} parent=1 // pred_check_branch
      %28 = sbr.rel (0) target = $region13
    $region12: #{tpu_custom_call.1} parent=1 // pred_region
      %30 = vsyncadd [#allocation4], 0
      %s32 = sshll.u32 [#allocation5], 4
      %s33 = int_to_ptr.vmem [resolvable:$true] %s32
      %s34 = sshll.u32 %s1, 4
      %s35 = int_to_ptr.hbm [resolvable:$true] %s34
      %37 = dma.vmem_to_hbm [thread:$0]  %s33, 128, %s35, [#allocation4]
    $region13: #{tpu_custom_call.1} parent=1 // pred_fallthru
      _
    // Predicated region
    $region14: #{tpu_custom_call.1} parent=1 // pred_check
      _
    $region15: #{tpu_custom_call.1} parent=1 // pred_check_branch
      %39 = sbr.rel (0) target = $region17
    $region16: #{tpu_custom_call.1} parent=1 // pred_region
      %41 = dma.done [#allocation4], 128
    $region17: #{tpu_custom_call.1} parent=1 // pred_fallthru
      _
    %42 = vsyncpa [#allocation3], 1
    %43 = vsyncpa [#allocation4], 1

</llo_original>
